<compile_context>
chip_gen: v5e
topology: v5e:2x2
jax: 0.10.0
libtpu: 0.0.40
codegen_flags: <defaults>
</compile_context>

<pallas_src>
import functools

import jax
import jax.numpy as jnp
from jax.experimental import pallas as pl
from jax.experimental.pallas import tpu as pltpu

LANE = 128
SUB = 8


def _soft_dice_kernel(x_ref, t_ref, out_ref, *, num_classes, fold):
    s = pl.program_id(1)

    @pl.when(s == 0)
    def _():
        out_ref[...] = jnp.zeros_like(out_ref)

    labels = t_ref[0]                                     # (T_rows, 128) int32

    # Numerically-stable softmax over the channel axis, fully elementwise:
    # channels are the leading (non-vreg) block dim, so max / sum over C are
    # C-1 jnp.maximum / adds on full (T_rows, 128) slabs (VPU), not XLU work.
    xs = [x_ref[0, c].astype(jnp.float32) for c in range(num_classes)]
    m = xs[0]
    for c in range(1, num_classes):
        m = jnp.maximum(m, xs[c])

    e_sum = jnp.zeros_like(m)
    e_sel = jnp.zeros_like(m)
    for c in range(num_classes):
        e = jnp.exp(xs[c] - m)                            # EUP
        e_sum = e_sum + e
        e_sel = jnp.where(labels == c, e, e_sel)          # fused one-hot gather

    inter = e_sel / e_sum                                 # = p[label] per pixel
    valid = ((labels >= 0) & (labels < num_classes)).astype(jnp.float32)

    # Fold (T_rows, 128) partials down to (8, 128) with elementwise adds and
    # accumulate straight into the resident output block (VPU adds only; no
    # scalar/XLU reductions inside the grid loop).
    out_ref[0, 0] += jnp.sum(inter.reshape(fold, SUB, LANE), axis=0)
    out_ref[0, 1] += jnp.sum(valid.reshape(fold, SUB, LANE), axis=0)


def soft_dice_loss(logits, target, num_classes=4, smooth=0.01):
    """logits: (B, C, W, H) float; target: (B, W, H) int labels in [0, C)."""
    # TODO(synk): optional `weight` branch of SoftDiceLoss (default weight=None) not implemented.
    B, C, W, H = logits.shape
    assert target.shape == (B, W, H)
    assert C == num_classes
    WH = W * H

    # --- spatial tiling: rows of 128 lanes, T_rows rows per grid step -------
    rows = -(-WH // LANE)                     # 128-lane rows needed
    rows8 = -(-rows // SUB) * SUB             # round up to whole (8,128) vregs
    t_rows = SUB
    for cand in (1024, 512, 256, 128, 64, 32, 16, 8):
        if cand <= rows8 and (-rows8) % cand <= max(SUB, rows8 // 8):
            t_rows = cand
            break
    rows_pad = -(-rows8 // t_rows) * t_rows
    wh_pad = rows_pad * LANE
    n_tiles = rows_pad // t_rows

    # Keep logits in their incoming dtype (no wrapper upcast); pad spatially
    # (only when needed) with zero logits / label -1 (contributes 0 to the
    # intersection and to the one-hot count).
    x = logits.reshape(B, C, WH)
    t = target.reshape(B, WH).astype(jnp.int32)
    if wh_pad != WH:
        x = jnp.pad(x, ((0, 0), (0, 0), (0, wh_pad - WH)))
        t = jnp.pad(t, ((0, 0), (0, wh_pad - WH)), constant_values=-1)
    x = x.reshape(B, C, rows_pad, LANE)
    t = t.reshape(B, rows_pad, LANE)

    kernel = functools.partial(
        _soft_dice_kernel, num_classes=C, fold=t_rows // SUB)

    partials = pl.pallas_call(
        kernel,
        out_shape=jax.ShapeDtypeStruct((B, 2, SUB, LANE), jnp.float32),
        grid_spec=pltpu.PrefetchScalarGridSpec(
            num_scalar_prefetch=0,
            grid=(B, n_tiles),
            in_specs=[
                pl.BlockSpec((1, C, t_rows, LANE), lambda b, s: (b, 0, s, 0)),
                pl.BlockSpec((1, t_rows, LANE), lambda b, s: (b, s, 0)),
            ],
            out_specs=pl.BlockSpec((1, 2, SUB, LANE), lambda b, s: (b, 0, 0, 0)),
        ),
        compiler_params=pltpu.CompilerParams(
            dimension_semantics=("parallel", "arbitrary")),
    )(x, t)

    inter = jnp.sum(partials[:, 0])           # sum(p * one_hot)
    t_sum = jnp.sum(partials[:, 1])           # sum(one_hot)
    p_sum = float(B * WH)                     # softmax sums to 1 per pixel
    return 1.0 - (2.0 * inter + smooth) / (p_sum + t_sum + smooth)


def _reference_soft_dice(logits, target, num_classes=4, smooth=0.01):
    p = jax.nn.softmax(logits.astype(jnp.float32), axis=1)        # (B, C, W, H)
    oh = jax.nn.one_hot(target, num_classes, dtype=jnp.float32)   # (B, W, H, C)
    oh = jnp.transpose(oh, (0, 3, 1, 2))                          # (B, C, W, H)
    inter = jnp.sum(p * oh)
    return 1.0 - (2.0 * inter + smooth) / (jnp.sum(p) + jnp.sum(oh) + smooth)


if __name__ == "__main__":
    key = jax.random.PRNGKey(0)
    k1, k2 = jax.random.split(key)

    B, C, W, H = 2, 4, 16, 16
    logits = jax.random.normal(k1, (B, C, W, H), dtype=jnp.float32)
    target = jax.random.randint(k2, (B, W, H), 0, C, dtype=jnp.int32)

    loss = soft_dice_loss(logits, target, num_classes=C, smooth=0.01)
    loss = jax.block_until_ready(loss)

    ref = _reference_soft_dice(logits, target, num_classes=C, smooth=0.01)
    assert jnp.allclose(loss, ref, atol=1e-5, rtol=1e-5), (loss, ref)

    print("KERNEL_OK")
</pallas_src>

<mosaic_0001>
module attributes {stable_mosaic.version = 11 : i64} {
  func.func @_soft_dice_kernel(%arg0: i32, %arg1: i32, %arg2: memref<1x4x8x128xf32, #tpu.memory_space<vmem>>, %arg3: memref<1x8x128xi32, #tpu.memory_space<vmem>>, %arg4: memref<1x2x8x128xf32, #tpu.memory_space<vmem>>) attributes {dimension_semantics = [#tpu.dimension_semantics<parallel>, #tpu.dimension_semantics<arbitrary>], iteration_bounds = array<i64: 2, 1>, scalar_prefetch = 0 : i64, scratch_operands = 0 : i64, tpu.core_type = #tpu.core_type<tc>, window_params = [{transform_indices = @transform_0, window_bounds = array<i64: 1, 4, 8, 128>}, {transform_indices = @transform_1, window_bounds = array<i64: 1, 8, 128>}, {transform_indices = @transform_2, window_bounds = array<i64: 1, 2, 8, 128>}]} {
    %c0_i32 = arith.constant 0 : i32
    %0 = arith.cmpi eq, %arg1, %c0_i32 : i32
    %1 = arith.extui %0 : i1 to i32
    %c0_i32_0 = arith.constant 0 : i32
    %2 = arith.cmpi ne, %1, %c0_i32_0 : i32
    scf.if %2 {
      %cst_37 = arith.constant 0.000000e+00 : f32
      %66 = vector.broadcast %cst_37 : f32 to vector<1x2x8x128xf32>
      %c0_38 = arith.constant 0 : index
      %c0_39 = arith.constant 0 : index
      %c0_40 = arith.constant 0 : index
      %c0_41 = arith.constant 0 : index
      %67 = vector.load %arg4[%c0_38, %c0_39, %c0_40, %c0_41] : memref<1x2x8x128xf32, #tpu.memory_space<vmem>>, vector<1x2x8x128xf32>
      tpu.vector_store %arg4[%c0_38, %c0_39, %c0_40, %c0_41], %66 {strides = array<i32>} : memref<1x2x8x128xf32, #tpu.memory_space<vmem>>, vector<1x2x8x128xf32>,
    } else {
    }
    %c0 = arith.constant 0 : index
    %c0_1 = arith.constant 0 : index
    %c0_2 = arith.constant 0 : index
    %3 = vector.load %arg3[%c0, %c0_1, %c0_2] : memref<1x8x128xi32, #tpu.memory_space<vmem>>, vector<1x8x128xi32>
    %4 = vector.shape_cast %3 : vector<1x8x128xi32> to vector<8x128xi32>
    %c0_3 = arith.constant 0 : index
    %c0_4 = arith.constant 0 : index
    %c0_5 = arith.constant 0 : index
    %c0_6 = arith.constant 0 : index
    %5 = vector.load %arg2[%c0_3, %c0_4, %c0_5, %c0_6] : memref<1x4x8x128xf32, #tpu.memory_space<vmem>>, vector<1x1x8x128xf32>
    %6 = vector.shape_cast %5 : vector<1x1x8x128xf32> to vector<8x128xf32>
    %c0_7 = arith.constant 0 : index
    %c1 = arith.constant 1 : index
    %c0_8 = arith.constant 0 : index
    %c0_9 = arith.constant 0 : index
    %7 = vector.load %arg2[%c0_7, %c1, %c0_8, %c0_9] : memref<1x4x8x128xf32, #tpu.memory_space<vmem>>, vector<1x1x8x128xf32>
    %8 = vector.shape_cast %7 : vector<1x1x8x128xf32> to vector<8x128xf32>
    %c0_10 = arith.constant 0 : index
    %c2 = arith.constant 2 : index
    %c0_11 = arith.constant 0 : index
    %c0_12 = arith.constant 0 : index
    %9 = vector.load %arg2[%c0_10, %c2, %c0_11, %c0_12] : memref<1x4x8x128xf32, #tpu.memory_space<vmem>>, vector<1x1x8x128xf32>
    %10 = vector.shape_cast %9 : vector<1x1x8x128xf32> to vector<8x128xf32>
    %c0_13 = arith.constant 0 : index
    %c3 = arith.constant 3 : index
    %c0_14 = arith.constant 0 : index
    %c0_15 = arith.constant 0 : index
    %11 = vector.load %arg2[%c0_13, %c3, %c0_14, %c0_15] : memref<1x4x8x128xf32, #tpu.memory_space<vmem>>, vector<1x1x8x128xf32>
    %12 = vector.shape_cast %11 : vector<1x1x8x128xf32> to vector<8x128xf32>
    %13 = arith.maximumf %6, %8 : vector<8x128xf32>
    %14 = arith.maximumf %13, %10 : vector<8x128xf32>
    %15 = arith.maximumf %14, %12 : vector<8x128xf32>
    %cst = arith.constant 0.000000e+00 : f32
    %16 = vector.broadcast %cst : f32 to vector<8x128xf32>
    %cst_16 = arith.constant 0.000000e+00 : f32
    %17 = vector.broadcast %cst_16 : f32 to vector<8x128xf32>
    %18 = arith.subf %6, %15 : vector<8x128xf32>
    %19 = math.exp %18 : vector<8x128xf32>
    %20 = arith.addf %16, %19 : vector<8x128xf32>
    %c0_i32_17 = arith.constant 0 : i32
    %21 = vector.broadcast %c0_i32_17 : i32 to vector<8x128xi32>
    %22 = arith.cmpi eq, %4, %21 : vector<8x128xi32>
    %23 = arith.select %22, %19, %17 : vector<8x128xi1>, vector<8x128xf32>
    %24 = arith.subf %8, %15 : vector<8x128xf32>
    %25 = math.exp %24 : vector<8x128xf32>
    %26 = arith.addf %20, %25 : vector<8x128xf32>
    %c1_i32 = arith.constant 1 : i32
    %27 = vector.broadcast %c1_i32 : i32 to vector<8x128xi32>
    %28 = arith.cmpi eq, %4, %27 : vector<8x128xi32>
    %29 = arith.select %28, %25, %23 : vector<8x128xi1>, vector<8x128xf32>
    %30 = arith.subf %10, %15 : vector<8x128xf32>
    %31 = math.exp %30 : vector<8x128xf32>
    %32 = arith.addf %26, %31 : vector<8x128xf32>
    %c2_i32 = arith.constant 2 : i32
    %33 = vector.broadcast %c2_i32 : i32 to vector<8x128xi32>
    %34 = arith.cmpi eq, %4, %33 : vector<8x128xi32>
    %35 = arith.select %34, %31, %29 : vector<8x128xi1>, vector<8x128xf32>
    %36 = arith.subf %12, %15 : vector<8x128xf32>
    %37 = math.exp %36 : vector<8x128xf32>
    %38 = arith.addf %32, %37 : vector<8x128xf32>
    %c3_i32 = arith.constant 3 : i32
    %39 = vector.broadcast %c3_i32 : i32 to vector<8x128xi32>
    %40 = arith.cmpi eq, %4, %39 : vector<8x128xi32>
    %41 = arith.select %40, %37, %35 : vector<8x128xi1>, vector<8x128xf32>
    %42 = arith.divf %41, %38 : vector<8x128xf32>
    %c0_i32_18 = arith.constant 0 : i32
    %43 = vector.broadcast %c0_i32_18 : i32 to vector<8x128xi32>
    %44 = arith.cmpi sge, %4, %43 : vector<8x128xi32>
    %c4_i32 = arith.constant 4 : i32
    %45 = vector.broadcast %c4_i32 : i32 to vector<8x128xi32>
    %46 = arith.cmpi slt, %4, %45 : vector<8x128xi32>
    %47 = arith.andi %44, %46 : vector<8x128xi1>
    %48 = arith.extui %47 : vector<8x128xi1> to vector<8x128xi32>
    %49 = arith.sitofp %48 : vector<8x128xi32> to vector<8x128xf32>
    %c0_19 = arith.constant 0 : index
    %c0_20 = arith.constant 0 : index
    %c0_21 = arith.constant 0 : index
    %c0_22 = arith.constant 0 : index
    %50 = vector.load %arg4[%c0_19, %c0_20, %c0_21, %c0_22] : memref<1x2x8x128xf32, #tpu.memory_space<vmem>>, vector<1x1x8x128xf32>
    %51 = vector.shape_cast %50 : vector<1x1x8x128xf32> to vector<8x128xf32>
    %52 = vector.shape_cast %42 : vector<8x128xf32> to vector<1x8x128xf32>
    %cst_23 = arith.constant dense<0.000000e+00> : vector<8x128xf32>
    %53 = vector.multi_reduction <add>, %52, %cst_23 [0] : vector<1x8x128xf32> to vector<8x128xf32>
    %54 = arith.addf %51, %53 : vector<8x128xf32>
    %c0_24 = arith.constant 0 : index
    %c0_25 = arith.constant 0 : index
    %c0_26 = arith.constant 0 : index
    %c0_27 = arith.constant 0 : index
    %55 = vector.load %arg4[%c0_24, %c0_25, %c0_26, %c0_27] : memref<1x2x8x128xf32, #tpu.memory_space<vmem>>, vector<1x1x8x128xf32>
    %56 = vector.shape_cast %55 : vector<1x1x8x128xf32> to vector<8x128xf32>
    %57 = vector.shape_cast %54 : vector<8x128xf32> to vector<1x1x8x128xf32>
    tpu.vector_store %arg4[%c0_24, %c0_25, %c0_26, %c0_27], %57 {strides = array<i32>} : memref<1x2x8x128xf32, #tpu.memory_space<vmem>>, vector<1x1x8x128xf32>,
    %c0_28 = arith.constant 0 : index
    %c1_29 = arith.constant 1 : index
    %c0_30 = arith.constant 0 : index
    %c0_31 = arith.constant 0 : index
    %58 = vector.load %arg4[%c0_28, %c1_29, %c0_30, %c0_31] : memref<1x2x8x128xf32, #tpu.memory_space<vmem>>, vector<1x1x8x128xf32>
    %59 = vector.shape_cast %58 : vector<1x1x8x128xf32> to vector<8x128xf32>
    %60 = vector.shape_cast %49 : vector<8x128xf32> to vector<1x8x128xf32>
    %cst_32 = arith.constant dense<0.000000e+00> : vector<8x128xf32>
    %61 = vector.multi_reduction <add>, %60, %cst_32 [0] : vector<1x8x128xf32> to vector<8x128xf32>
    %62 = arith.addf %59, %61 : vector<8x128xf32>
    %c0_33 = arith.constant 0 : index
    %c1_34 = arith.constant 1 : index
    %c0_35 = arith.constant 0 : index
    %c0_36 = arith.constant 0 : index
    %63 = vector.load %arg4[%c0_33, %c1_34, %c0_35, %c0_36] : memref<1x2x8x128xf32, #tpu.memory_space<vmem>>, vector<1x1x8x128xf32>
    %64 = vector.shape_cast %63 : vector<1x1x8x128xf32> to vector<8x128xf32>
    %65 = vector.shape_cast %62 : vector<8x128xf32> to vector<1x1x8x128xf32>
    tpu.vector_store %arg4[%c0_33, %c1_34, %c0_35, %c0_36], %65 {strides = array<i32>} : memref<1x2x8x128xf32, #tpu.memory_space<vmem>>, vector<1x1x8x128xf32>,
    return
  }
  func.func @transform_0(%arg0: i32, %arg1: i32) -> (i32, i32, i32, i32) {
    %c0_i32 = arith.constant 0 : i32
    %c0_i32_0 = arith.constant 0 : i32
    %c0_i32_1 = arith.constant 0 : i32
    return %arg0, %c0_i32, %arg1, %c0_i32_0 : i32, i32, i32, i32
  }
  func.func @transform_1(%arg0: i32, %arg1: i32) -> (i32, i32, i32) {
    %c0_i32 = arith.constant 0 : i32
    %c0_i32_0 = arith.constant 0 : i32
    return %arg0, %arg1, %c0_i32 : i32, i32, i32
  }
  func.func @transform_2(%arg0: i32, %arg1: i32) -> (i32, i32, i32, i32) {
    %c0_i32 = arith.constant 0 : i32
    %c0_i32_0 = arith.constant 0 : i32
    %c0_i32_1 = arith.constant 0 : i32
    %c0_i32_2 = arith.constant 0 : i32
    return %arg0, %c0_i32, %c0_i32_0, %c0_i32_1 : i32, i32, i32, i32
  }
}

</mosaic_0001>

<llo_original>
// kernel: tpu_custom_call.1
$region0: #{tpu_custom_call.1}
  #allocation0 [shape = 'u32[]', space=smem, size = 0x4, offset = 0x4, fixed_abs, tag = 'smem constant byte address 0x4 - core index']
  #allocation1 [shape = 'u32[72,128]{1,0:T(1,128)}', space=vmem, size = 0x9000, scoped, tag = 'internal scratch']
  %s0 = inlined_call_operand.hbm [shape: f32[2,4,8,128], index: 0, kind: input, shape index: {}]
  %s1 = inlined_call_operand.hbm [shape: s32[2,8,128], index: 1, kind: input, shape index: {}]
  %s2 = inlined_call_operand.hbm [shape: f32[2,2,8,128], index: 2, kind: output, shape index: {}]
  %s3 = sld [smem:[#allocation0]]
  $region53: #{tpu_custom_call.1} parent=0
    _
  %s5 = ssub.s32 1, %s3
  %s6 = scalar_select 0, %s5, %s3
  $region1: #{tpu_custom_call.1} parent=0
    #allocation2 [shape = 'u8[32768]{0}', space=vmem, size = 0x8000, scoped, tag = 'input window, operand 0']
    #allocation3 [shape = 's32[2]{0}', space=sflag, size = 0x8, scoped, tag = 'scoped memory for tpu_custom_call.1']
    #allocation4 [shape = 's32[2]{0}', space=sflag, size = 0x8, scoped, tag = 'scoped memory for tpu_custom_call.1']
    #allocation5 [shape = 'u8[8192]{0}', space=vmem, size = 0x2000, scoped, tag = 'input window, operand 1']
    #allocation6 [shape = 's32[2]{0}', space=sflag, size = 0x8, scoped, tag = 'scoped memory for tpu_custom_call.1']
    #allocation7 [shape = 'u8[16384]{0}', space=vmem, size = 0x4000, scoped, tag = 'output window, operand 0']
    %7 = vsyncpa [#allocation3], 0
    %s8 = scalar_lea.sflag [#allocation3], 1
    %9 = vsyncpa %s8, 0
    %10 = vsyncpa [#allocation6], 0
    %s11 = scalar_lea.sflag [#allocation6], 1
    %12 = vsyncpa %s11, 0
    %13 = vsyncpa [#allocation4], 0
    %s14 = scalar_lea.sflag [#allocation4], 1
    %15 = vsyncpa %s14, 0
    loop: start=0, step=1, limit=4
    $region2: #{tpu_custom_call.1} parent=1 // loop_pre_header
      _
    $region3: #{tpu_custom_call.1} parent=1 // loop_header
      %s17 = sphi 0, %s21
      %p18 = scmp.ge.s32.totalorder %s17, 4
      %s24 = sphi 0, %s36
      %s25 = sphi 0, %s32
      %s26 = sphi 0, %s24
      %s27 = sphi 0, %s25
      %s28 = sphi 0, %s26
      %s29 = sphi 0, %s27
      %s41 = sphi 0, %s43
      %s44 = sphi 0, %s41
      %s45 = sphi 0, %s44
      %s61 = sphi 0, %s45
      %s69 = sphi 0, %s71
      %s72 = sphi 0, %s69
      %s73 = sphi 0, %s72
      %s89 = sphi 0, %s73
      %s95 = sphi 0, %s97
      %s98 = sphi 0, %s95
      %s99 = sphi 0, %s98
      %s115 = sphi 0, %s99
    $region4: #{tpu_custom_call.1} parent=1 // loop_header_branch
      %20 = sbr.rel (%p18) target = $region8
    $region5: #{tpu_custom_call.1} parent=1 // loop_body
      %s22 = ssub.s32 %s17, 1
      %s23 = ssub.s32 %s17, 2
      %s30 = sadd.s32 1, %s25
      %p31 = scmp.ge.s32.totalorder %s30, 1
      %s32 = scalar_select %p31, 0, %s30
      %s33 = sadd.s32 1, %s24
      %s34 = scalar_select %p31, %s33, %s24
      %p35 = scmp.ge.s32.totalorder %s34, 2
      %s36 = scalar_select %p35, 0, %s34
      %s37 = ssub.s32 %s24, %s36
      %s38 = ssub.s32 %s25, %s32
      %s39 = sor.u32 %s37, %s38
      %p40 = scmp.eq.s32.totalorder %s39, 0
      %s42 = sadd.s32 %s41, 1
      %s43 = scalar_select %p40, %s41, %s42
      %p46 = pneg %p40
      %p47 = scmp.eq.s32.totalorder %s17, 1
      %p48 = por %p46, %p47
      %p49 = scmp.ne.s32.totalorder %s41, %s44
      %p50 = scmp.eq.s32.totalorder %s17, 0
      %p51 = por %p49, %p50
      %p52 = scmp.ne.s32.totalorder %s41, %s44
      %p53 = scmp.eq.s32.totalorder %s22, 1
      %p54 = por %p52, %p53
      %p55 = scmp.ne.s32.totalorder %s44, %s45
      %p56 = scmp.eq.s32.totalorder %s22, 0
      %p57 = por %p55, %p56
      %p58 = scmp.ne.s32.totalorder %s44, %s45
      %p59 = scmp.eq.s32.totalorder %s23, 1
      %p60 = por %p58, %p59
      %p62 = scmp.ne.s32.totalorder %s45, %s61
      %p63 = scmp.eq.s32.totalorder %s23, 0
      %p64 = por %p62, %p63
      %s65 = ssub.s32 %s24, %s36
      %s66 = ssub.s32 %s25, %s32
      %s67 = sor.u32 %s65, %s66
      %p68 = scmp.eq.s32.totalorder %s67, 0
      %s70 = sadd.s32 %s69, 1
      %s71 = scalar_select %p68, %s69, %s70
      %p74 = pneg %p68
      %p75 = scmp.eq.s32.totalorder %s17, 1
      %p76 = por %p74, %p75
      %p77 = scmp.ne.s32.totalorder %s69, %s72
      %p78 = scmp.eq.s32.totalorder %s17, 0
      %p79 = por %p77, %p78
      %p80 = scmp.ne.s32.totalorder %s69, %s72
      %p81 = scmp.eq.s32.totalorder %s22, 1
      %p82 = por %p80, %p81
      %p83 = scmp.ne.s32.totalorder %s72, %s73
      %p84 = scmp.eq.s32.totalorder %s22, 0
      %p85 = por %p83, %p84
      %p86 = scmp.ne.s32.totalorder %s72, %s73
      %p87 = scmp.eq.s32.totalorder %s23, 1
      %p88 = por %p86, %p87
      %p90 = scmp.ne.s32.totalorder %s73, %s89
      %p91 = scmp.eq.s32.totalorder %s23, 0
      %p92 = por %p90, %p91
      %s93 = ssub.s32 %s24, %s36
      %p94 = scmp.eq.s32.totalorder %s93, 0
      %s96 = sadd.s32 %s95, 1
      %s97 = scalar_select %p94, %s95, %s96
      %p100 = pneg %p94
      %p101 = scmp.eq.s32.totalorder %s17, 1
      %p102 = por %p100, %p101
      %p103 = scmp.ne.s32.totalorder %s95, %s98
      %p104 = scmp.eq.s32.totalorder %s17, 0
      %p105 = por %p103, %p104
      %p106 = scmp.ne.s32.totalorder %s95, %s98
      %p107 = scmp.eq.s32.totalorder %s22, 1
      %p108 = por %p106, %p107
      %p109 = scmp.ne.s32.totalorder %s98, %s99
      %p110 = scmp.eq.s32.totalorder %s22, 0
      %p111 = por %p109, %p110
      %p112 = scmp.ne.s32.totalorder %s98, %s99
      %p113 = scmp.eq.s32.totalorder %s23, 1
      %p114 = por %p112, %p113
      %p116 = scmp.ne.s32.totalorder %s99, %s115
      %p117 = scmp.eq.s32.totalorder %s23, 0
      %p118 = por %p116, %p117
      %p119 = scmp.le.s32.totalorder 1, %s17
      %p120 = scmp.lt.s32.totalorder %s17, 3
      %p121 = pnand %p119, %p120
      %p122 = pneg %p121
      // Predicated region
      $region9: #{tpu_custom_call.1} parent=5 // pred_check
        _
      $region10: #{tpu_custom_call.1} parent=5 // pred_check_branch
        %124 = sbr.rel (%p121) target = $region12
      $region11: #{tpu_custom_call.1} parent=5 // pred_region
        %s125 = ssub.s32 %s17, 1
      $region12: #{tpu_custom_call.1} parent=5 // pred_fallthru
        _
      %p126 = scmp.lt.s32.totalorder %s17, 2
      // Predicated region
      $region13: #{tpu_custom_call.1} parent=5 // pred_check
        %p127 = pneg %p126
      $region14: #{tpu_custom_call.1} parent=5 // pred_check_branch
        %129 = sbr.rel (%p127) target = $region16
      $region15: #{tpu_custom_call.1} parent=5 // pred_region
        // Predicated region
        $region17: #{tpu_custom_call.1} parent=15 // pred_check
          %p130 = pneg %p51
        $region18: #{tpu_custom_call.1} parent=15 // pred_check_branch
          %132 = sbr.rel (%p130) target = $region20
        $region19: #{tpu_custom_call.1} parent=15 // pred_region
          %s133 = sand.u32 %s41, 1
          %s134 = scalar_lea.sflag [#allocation3], %s133
          %s135 = sand.u32 %s41, 1
          %s136 = smul.addr %s135, 32
          %s137 = scalar_lea.vmem [#allocation2], %s136
          %139 = vsyncadd %s134, 0
          %s140 = smul.addr %s24, 4
          %s141 = sadd.s32 %s25, %s140
          %s142 = smul.addr %s141, 8
          %s143 = scalar_lea.hbm %s0, %s142
          %s144 = sshll.u32 %s143, 4
          %s145 = int_to_ptr.hbm [resolvable:$true] %s144
          %s146 = sshll.u32 %s137, 4
          %s147 = int_to_ptr.vmem [resolvable:$true] %s146
          %152 = dma.hbm_to_vmem [thread:$0]  %s145, 512, %s147, %s134, 128, 128, 8
        $region20: #{tpu_custom_call.1} parent=15 // pred_fallthru
          _
        // Predicated region
        $region21: #{tpu_custom_call.1} parent=15 // pred_check
          %p153 = pneg %p79
        $region22: #{tpu_custom_call.1} parent=15 // pred_check_branch
          %155 = sbr.rel (%p153) target = $region24
        $region23: #{tpu_custom_call.1} parent=15 // pred_region
          %s156 = sand.u32 %s69, 1
          %s157 = scalar_lea.sflag [#allocation6], %s156
          %s158 = sand.u32 %s69, 1
          %s159 = smul.addr %s158, 8
          %s160 = scalar_lea.vmem [#allocation5], %s159
          %162 = vsyncadd %s157, 0
          %s163 = sadd.s32 %s25, %s24
          %s164 = smul.addr %s163, 8
          %s165 = scalar_lea.hbm %s1, %s164
          %s167 = sshll.u32 %s165, 4
          %s168 = int_to_ptr.hbm [resolvable:$true] %s167
          %s169 = sshll.u32 %s160, 4
          %s170 = int_to_ptr.vmem [resolvable:$true] %s169
          %172 = dma.hbm_to_vmem [thread:$0]  %s168, 128, %s170, %s157
        $region24: #{tpu_custom_call.1} parent=15 // pred_fallthru
          _
      $region16: #{tpu_custom_call.1} parent=5 // pred_fallthru
        _
      %p173 = scmp.le.s32.totalorder 1, %s17
      %p174 = scmp.lt.s32.totalorder %s17, 3
      %p175 = pnand %p173, %p174
      %p176 = pneg %p175
      // Predicated region
      $region25: #{tpu_custom_call.1} parent=5 // pred_check
        _
      $region26: #{tpu_custom_call.1} parent=5 // pred_check_branch
        %178 = sbr.rel (%p175) target = $region28
      $region27: #{tpu_custom_call.1} parent=5 // pred_region
        %s179 = ssub.s32 %s17, 1
        %s180 = sand.u32 %s44, 1
        %s181 = scalar_lea.sflag [#allocation3], %s180
        %s182 = sand.u32 %s44, 1
        %s183 = smul.addr %s182, 32
        %s184 = scalar_lea.vmem [#allocation2], %s183
        // Predicated region
        $region29: #{tpu_custom_call.1} parent=27 // pred_check
          %p185 = pneg %p57
        $region30: #{tpu_custom_call.1} parent=27 // pred_check_branch
          %187 = sbr.rel (%p185) target = $region32
        $region31: #{tpu_custom_call.1} parent=27 // pred_region
          %189 = dma.done %s181, 512
        $region32: #{tpu_custom_call.1} parent=27 // pred_fallthru
          _
        %s190 = sand.u32 %s72, 1
        %s191 = scalar_lea.sflag [#allocation6], %s190
        %s192 = sand.u32 %s72, 1
        %s193 = smul.addr %s192, 8
        %s194 = scalar_lea.vmem [#allocation5], %s193
        // Predicated region
        $region33: #{tpu_custom_call.1} parent=27 // pred_check
          %p195 = pneg %p85
        $region34: #{tpu_custom_call.1} parent=27 // pred_check_branch
          %197 = sbr.rel (%p195) target = $region36
        $region35: #{tpu_custom_call.1} parent=27 // pred_region
          %199 = dma.done %s191, 128
        $region36: #{tpu_custom_call.1} parent=27 // pred_fallthru
          _
        %s200 = sand.u32 %s44, 1
        %s201 = scalar_lea.sflag [#allocation3], %s200
        %s202 = sand.u32 %s44, 1
        %s203 = smul.addr %s202, 32
        %s204 = scalar_lea.vmem [#allocation2], %s203
        %p205 = pneg %p57
        %p206 = pneg %p54
        %s207 = sand.u32 %s72, 1
        %s208 = scalar_lea.sflag [#allocation6], %s207
        %s209 = sand.u32 %s72, 1
        %s210 = smul.addr %s209, 8
        %s211 = scalar_lea.vmem [#allocation5], %s210
        %p212 = pneg %p85
        %p213 = pneg %p82
        %p214 = pneg %p111
        %p215 = pneg %p108
        %s216 = sand.u32 %s98, 1
        %s217 = scalar_lea.sflag [#allocation4], %s216
        %s218 = sand.u32 %s98, 1
        %s219 = smul.addr %s218, 16
        %s220 = scalar_lea.vmem [#allocation7], %s219
        %p221 = scmp.eq.s32.totalorder %s27, 0
        // Predicated region
        $region37: #{tpu_custom_call.1} parent=27 // pred_check
          %p222 = pneg %p221
        $region38: #{tpu_custom_call.1} parent=27 // pred_check_branch
          %224 = sbr.rel (%p222) target = $region40
        $region39: #{tpu_custom_call.1} parent=27 // pred_region
          %225 = vst [vmem:[%s220] sm:$0xff] 0.0
          %226 = vst [vmem:[%s220 + $0x8] sm:$0xff] 0.0
        $region40: #{tpu_custom_call.1} parent=27 // pred_fallthru
          _
        %v227 = vld [vmem:[%s194] sm:$0xff]
        %v228 = vld [vmem:[%s184] sm:$0xff]
        %s229 = scalar_lea.vmem %s184, 8 [#allocation2]
        %v230 = vld [vmem:[%s229] sm:$0xff]
        %s231 = scalar_lea.vmem %s184, 16 [#allocation2]
        %v232 = vld [vmem:[%s231] sm:$0xff]
        %s233 = scalar_lea.vmem %s184, 24 [#allocation2]
        %v234 = vld [vmem:[%s233] sm:$0xff]
        %v235 = vmax.f32 %v228, %v230
        %v236 = vmax.f32 %v235, %v232
        %v237 = vmax.f32 %v236, %v234
        %v238 = vsub.f32 %v228, %v237
        %v239 = vmul.f32 %v238, 1.442695
        %v240 = vpow.pop %v239
        %v241 = vadd.f32 %v240, 0.0
        %vm242 = vcmp.eq.s32.totalorder %v227, 0
        %v243 = vsel %vm242, %v240, 0.0
        %v244 = vsub.f32 %v230, %v237
        %v245 = vmul.f32 %v244, 1.442695
        %v246 = vpow.pop %v245
        %v247 = vadd.f32 %v241, %v246
        %vm248 = vcmp.eq.s32.totalorder %v227, 1
        %v249 = vsel %vm248, %v246, %v243
        %v250 = vsub.f32 %v232, %v237
        %v251 = vmul.f32 %v250, 1.442695
        %v252 = vpow.pop %v251
        %v253 = vadd.f32 %v247, %v252
        %vm254 = vcmp.eq.s32.totalorder %v227, 2
        %v255 = vsel %vm254, %v252, %v249
        %v256 = vsub.f32 %v234, %v237
        %v257 = vmul.f32 %v256, 1.442695
        %v258 = vpow.pop %v257
        %v259 = vadd.f32 %v253, %v258
        %vm260 = vcmp.eq.s32.totalorder %v227, 3
        %v261 = vsel %vm260, %v258, %v255
        %v262 = vrcp.pop %v259
        %v263 = vmul.f32 %v259, %v262
        %v264 = vsub.f32 1.0, %v263
        %v265 = vmul.f32 %v262, %v264
        %v266 = vadd.f32 %v262, %v265
        %vm267 = vweird.f32 %v259
        %vm268 = vweird.f32 %v262
        %vm269 = vmor %vm267, %vm268
        %v270 = vsel %vm269, %v262, %v266
        %v271 = vand.u32 2147483647, %v259
        %vm272 = vcmp.eq.f32.partialorder %v271, 8.507059e+37
        %v273 = vand.u32 %v259, 2147483648
        %v274 = vor.u32 1.1754944e-38, %v273
        %v275 = vsel %vm272, %v274, %v270
        %v276 = vmul.f32 %v261, %v275
        %vm277 = vcmp.ge.s32.totalorder %v227, 0
        %vm278 = vcmp.lt.s32.totalorder %v227, 4
        %vm279 = vmand %vm277, %vm278
        %v280 = vsel %vm279, 1, 0
        %v281 = vcvt.s32.f32 %v280
        %v282 = vld [vmem:[%s220] sm:$0xff]
        %v283 = vadd.f32 %v276, 0.0
        %v284 = vadd.f32 %v282, %v283
        %285 = vst [vmem:[%s220] sm:$0xff] %v284
        %s286 = scalar_lea.vmem %s220, 8 [#allocation7]
        %v287 = vld [vmem:[%s286] sm:$0xff]
        %v288 = vadd.f32 %v281, 0.0
        %v289 = vadd.f32 %v287, %v288
        %290 = vst [vmem:[%s286] sm:$0xff] %v289
        %s291 = sand.u32 %s98, 1
        %s292 = scalar_lea.sflag [#allocation4], %s291
        %s293 = sand.u32 %s98, 1
        %s294 = smul.addr %s293, 16
        %s295 = scalar_lea.vmem [#allocation7], %s294
        // Predicated region
        $region41: #{tpu_custom_call.1} parent=27 // pred_check
          %p296 = pneg %p108
        $region42: #{tpu_custom_call.1} parent=27 // pred_check_branch
          %298 = sbr.rel (%p296) target = $region44
        $region43: #{tpu_custom_call.1} parent=27 // pred_region
          %300 = vsyncadd %s292, 0
          %s301 = smul.addr %s26, 2
          %s302 = smul.addr %s301, 8
          %s303 = scalar_lea.hbm %s2, %s302
          %s304 = sshll.u32 %s295, 4
          %s305 = int_to_ptr.vmem [resolvable:$true] %s304
          %s306 = sshll.u32 %s303, 4
          %s307 = int_to_ptr.hbm [resolvable:$true] %s306
          %312 = dma.vmem_to_hbm [thread:$0]  %s305, 256, %s307, %s292, 128, 128, 8
        $region44: #{tpu_custom_call.1} parent=27 // pred_fallthru
          _
      $region28: #{tpu_custom_call.1} parent=5 // pred_fallthru
        _
      %p313 = scmp.le.s32.totalorder 2, %s17
      // Predicated region
      $region45: #{tpu_custom_call.1} parent=5 // pred_check
        %p314 = pneg %p313
      $region46: #{tpu_custom_call.1} parent=5 // pred_check_branch
        %316 = sbr.rel (%p314) target = $region48
      $region47: #{tpu_custom_call.1} parent=5 // pred_region
        %s317 = ssub.s32 %s17, 2
        // Predicated region
        $region49: #{tpu_custom_call.1} parent=47 // pred_check
          %p318 = pneg %p114
        $region50: #{tpu_custom_call.1} parent=47 // pred_check_branch
          %320 = sbr.rel (%p318) target = $region52
        $region51: #{tpu_custom_call.1} parent=47 // pred_region
          %s321 = sand.u32 %s99, 1
          %s322 = scalar_lea.sflag [#allocation4], %s321
          %s323 = sand.u32 %s99, 1
          %s324 = smul.addr %s323, 16
          %s325 = scalar_lea.vmem [#allocation7], %s324
          %327 = dma.done %s322, 256
        $region52: #{tpu_custom_call.1} parent=47 // pred_fallthru
          _
      $region48: #{tpu_custom_call.1} parent=5 // pred_fallthru
        _
    $region6: #{tpu_custom_call.1} parent=1 // loop_footer
      %s21 = sadd.s32 1, %s17
    $region7: #{tpu_custom_call.1} parent=1 // loop_footer_branch
      %16 = sbr.rel target = $region3
    $region8: #{tpu_custom_call.1} parent=1 // loop_exit
      _
    %328 = vsyncpa [#allocation3], 1
    %s329 = scalar_lea.sflag [#allocation3], 1
    %330 = vsyncpa %s329, 1
    %331 = vsyncpa [#allocation6], 1
    %s332 = scalar_lea.sflag [#allocation6], 1
    %333 = vsyncpa %s332, 1
    %334 = vsyncpa [#allocation4], 1
    %s335 = scalar_lea.sflag [#allocation4], 1
    %336 = vsyncpa %s335, 1

</llo_original>
